<compile_context>
chip_gen: v6e
topology: v6e:2x2x1
jax: 0.10.0
libtpu: 0.0.40
codegen_flags: <defaults>
</compile_context>

<pallas_src>
import functools
import math

import jax
import jax.numpy as jnp
from jax import lax
from jax.experimental import pallas as pl
from jax.experimental.pallas import tpu as pltpu


def _round_up(x, m):
    return ((x + m - 1) // m) * m


def _choose_tm(m, target):
    """Largest row tile (multiple of 16, else 8) <= target that divides m exactly,
    preferring >= 2 grid steps so v7x can shard the M axis across both TensorCores.
    Returns 0 if no such divisor exists (caller falls back to padding)."""
    def search(step):
        hi = min(target, m)
        hi -= hi % step
        best_single = 0
        for t in range(hi, 0, -step):
            if m % t == 0:
                if m // t >= 2:
                    return t
                best_single = max(best_single, t)
        return best_single

    t = search(16)
    if t:
        return t
    return search(8)


# ----------------------------- Pallas kernel ------------------------------ #
def _proj_ln_kernel(x_ref, w_ref, p_ref, o_ref):
    """x_ref: (tm, K) patch rows; w_ref: (K, E) projection weight;
    p_ref: (3, E) f32 = [conv bias; ln gamma; ln beta]; o_ref: (tm, E).

    GEMM on the MXU with f32 accumulation, then bias + LayerNorm over E entirely
    in f32 (important on v5e: no bf16 VPU/EUP); single dtype cast at the store.
    """
    y = jnp.dot(x_ref[...], w_ref[...], preferred_element_type=jnp.float32)
    y = y + p_ref[0:1, :]                                # conv bias (f32)

    mean = jnp.mean(y, axis=-1, keepdims=True)
    yc = y - mean                                        # centered (PyTorch LN form)
    var = jnp.mean(yc * yc, axis=-1, keepdims=True)
    inv = lax.rsqrt(var + 1e-5) * p_ref[1:2, :]          # fused gamma * rsqrt
    o_ref[...] = (yc * inv + p_ref[2:3, :]).astype(o_ref.dtype)


def proj_layernorm(patches, w_flat, bias, gamma, beta, *, tm=512,
                   out_dtype=jnp.bfloat16):
    """patches: (M, K); w_flat: (K, E); bias/gamma/beta: (E,) -> (M, E) out_dtype.

    No K/E padding: BlockSpecs use full-extent last dims so arrays stay unpadded
    in HBM. The row tile divides M exactly whenever possible (no post-slice).
    """
    M, K = patches.shape
    E = w_flat.shape[1]

    # Pack the three per-feature vectors into one small operand.
    params = jnp.stack([bias, gamma, beta]).astype(jnp.float32)     # (3, E)

    tm_eff = _choose_tm(M, tm)
    if tm_eff == 0:
        # Rare fallback: M has no multiple-of-8 divisor <= tm -> pad rows + slice.
        tm_eff = min(_round_up(tm, 8), _round_up(M, 8))
        m_pad = _round_up(M, tm_eff)
        patches_in = jnp.pad(patches, ((0, m_pad - M), (0, 0)))
    else:
        m_pad = M
        patches_in = patches

    in_itemsize = jnp.dtype(patches_in.dtype).itemsize
    out_itemsize = jnp.dtype(out_dtype).itemsize

    out = pl.pallas_call(
        _proj_ln_kernel,
        out_shape=jax.ShapeDtypeStruct((m_pad, E), out_dtype),
        grid_spec=pltpu.PrefetchScalarGridSpec(
            num_scalar_prefetch=0,
            grid=(m_pad // tm_eff,),
            in_specs=[
                # Full-extent K (block dim == array dim): no K padding in HBM.
                pl.BlockSpec((tm_eff, K), lambda i: (i, 0)),
                # Full weight resident in VMEM across all grid steps.
                pl.BlockSpec((K, E), lambda i: (0, 0)),
                # bias / gamma / beta packed.
                pl.BlockSpec((3, E), lambda i: (0, 0)),
            ],
            out_specs=pl.BlockSpec((tm_eff, E), lambda i: (i, 0)),
        ),
        compiler_params=pltpu.CompilerParams(
            # Independent M tiles: lets v7x shard the grid across its 2 TensorCores.
            dimension_semantics=("parallel",),
            # NOTE: for late-stage shapes (K ~ 3k, E ~ 512) on v7x (32 MiB scoped
            # VMEM default), keep tm <= 512 or raise vmem_limit_bytes here.
        ),
        cost_estimate=pl.CostEstimate(
            flops=2 * m_pad * K * E,
            transcendentals=m_pad,
            bytes_accessed=int(m_pad * K * in_itemsize
                               + K * E * jnp.dtype(w_flat.dtype).itemsize
                               + 3 * E * 4
                               + m_pad * E * out_itemsize),
        ),
    )(patches_in, w_flat, params)

    return out if m_pad == M else out[:M]


# ------------------------------- JAX glue ---------------------------------- #
def _im2col_nhwc(xp, kh, kw, stride, h_out, w_out):
    """xp: spatially padded NHWC image (B, Hp, Wp, C) in the compute dtype.
    Returns (B*h_out*w_out, kh*kw*C) with (kh, kw, C) feature order.
    The feature axis is already minor, so no big transpose is materialized;
    the only large HBM write is the single stacked patch matrix itself."""
    B, _, _, C = xp.shape
    taps = []
    for di in range(kh):
        for dj in range(kw):
            taps.append(
                xp[:, di:di + stride * (h_out - 1) + 1:stride,
                      dj:dj + stride * (w_out - 1) + 1:stride, :])
    patch = jnp.stack(taps, axis=3)                 # (B, h_out, w_out, kh*kw, C)
    return patch.reshape(B * h_out * w_out, kh * kw * C)


def overlap_patch_embed(x, conv_w, conv_b, ln_g, ln_b, *, patch_size=7, stride=4,
                        tm=512, compute_dtype=jnp.bfloat16, out_dtype=None):
    """Forward pass of OverlapPatchEmbed. x: (B, C, H, W) NCHW.
    Returns ((B, H_out*W_out, E) array in out_dtype, H_out, W_out)."""
    B, C, H, W = x.shape
    kh = kw = patch_size
    pad = patch_size // 2
    h_out = (H + 2 * pad - kh) // stride + 1
    w_out = (W + 2 * pad - kw) // stride + 1
    E = conv_w.shape[0]
    if out_dtype is None:
        out_dtype = compute_dtype

    # One small NHWC + cast + spatial-pad copy of the input (≈ input-sized, not
    # im2col-sized); everything downstream is already in the kernel's layout.
    xp = jnp.pad(jnp.transpose(x, (0, 2, 3, 1)).astype(compute_dtype),
                 ((0, 0), (pad, pad), (pad, pad), (0, 0)))
    patches = _im2col_nhwc(xp, kh, kw, stride, h_out, w_out)          # (M, K)

    # (E, C, kh, kw) -> (kh, kw, C, E) -> (K, E): matches the patch feature order,
    # so the big patch matrix never needs a transpose.
    w_flat = jnp.transpose(conv_w, (2, 3, 1, 0)).reshape(kh * kw * C, E)
    w_flat = w_flat.astype(compute_dtype)

    out = proj_layernorm(patches, w_flat, conv_b, ln_g, ln_b,
                         tm=tm, out_dtype=out_dtype)                  # (M, E)
    return out.reshape(B, h_out * w_out, E), h_out, w_out


# ------------------------------- reference --------------------------------- #
def reference(x, conv_w, conv_b, ln_g, ln_b, *, patch_size=7, stride=4):
    pad = patch_size // 2
    y = lax.conv_general_dilated(
        x, conv_w, window_strides=(stride, stride),
        padding=((pad, pad), (pad, pad)),
        dimension_numbers=("NCHW", "OIHW", "NCHW"))
    y = y + conv_b.reshape(1, -1, 1, 1)
    B, E, Ho, Wo = y.shape
    y = y.reshape(B, E, Ho * Wo).transpose(0, 2, 1)   # (B, N, E)
    mean = jnp.mean(y, axis=-1, keepdims=True)
    var = jnp.mean((y - mean) ** 2, axis=-1, keepdims=True)
    y = (y - mean) / jnp.sqrt(var + 1e-5)
    return y * ln_g + ln_b, Ho, Wo


# --------------------------------- main ------------------------------------ #
if __name__ == "__main__":
    key = jax.random.PRNGKey(0)
    k_x, k_w = jax.random.split(key)

    # Small shapes consistent with the module: img=16, patch=7, stride=4,
    # in_chans=4, embed_dim=32  ->  H_out = W_out = 4, num_patches = 16.
    B, C, HW = 2, 4, 16
    patch_size, stride, embed_dim = 7, 4, 32

    x = jax.random.normal(k_x, (B, C, HW, HW), dtype=jnp.float32)

    # Deterministic parameter init mirroring PyTorch _init_weights:
    fan_out = patch_size * patch_size * embed_dim
    conv_w = jax.random.normal(
        k_w, (embed_dim, C, patch_size, patch_size), dtype=jnp.float32
    ) * math.sqrt(2.0 / fan_out)
    conv_b = jnp.zeros((embed_dim,), jnp.float32)
    ln_g = jnp.ones((embed_dim,), jnp.float32)
    ln_b = jnp.zeros((embed_dim,), jnp.float32)

    ref_out, Ho_r, Wo_r = reference(
        x, conv_w, conv_b, ln_g, ln_b, patch_size=patch_size, stride=stride)
    ref_out = jax.block_until_ready(ref_out)

    # f32 path (tight tolerance): validates exact semantics of the fused kernel.
    out_f32, Ho, Wo = overlap_patch_embed(
        x, conv_w, conv_b, ln_g, ln_b, patch_size=patch_size, stride=stride,
        compute_dtype=jnp.float32, out_dtype=jnp.float32)
    out_f32 = jax.block_until_ready(out_f32)

    assert out_f32.shape == (B, Ho * Wo, embed_dim)
    assert (Ho, Wo) == (Ho_r, Wo_r) == (HW // stride, HW // stride)
    assert jnp.allclose(out_f32, ref_out, atol=1e-3, rtol=1e-3)

    # Fast path: bf16 matmul inputs + bf16 output, f32 accumulation + LayerNorm.
    # (Results differ from the f32 PyTorch conv at ~1e-2 level by design.)
    out_bf16, Ho2, Wo2 = overlap_patch_embed(
        x, conv_w, conv_b, ln_g, ln_b, patch_size=patch_size, stride=stride)
    out_bf16 = jax.block_until_ready(out_bf16)

    assert out_bf16.dtype == jnp.bfloat16
    assert out_bf16.shape == (B, Ho2 * Wo2, embed_dim)
    assert (Ho2, Wo2) == (Ho_r, Wo_r)
    assert jnp.allclose(out_bf16.astype(jnp.float32), ref_out, atol=5e-2, rtol=5e-2)

    print("KERNEL_OK")
</pallas_src>

<mosaic_0001>
module attributes {stable_mosaic.version = 11 : i64} {
  func.func @_proj_ln_kernel(%arg0: i32, %arg1: memref<16x196xf32, #tpu.memory_space<vmem>>, %arg2: memref<196x32xf32, #tpu.memory_space<vmem>>, %arg3: memref<3x32xf32, #tpu.memory_space<vmem>>, %arg4: memref<16x32xf32, #tpu.memory_space<vmem>>) attributes {dimension_semantics = [#tpu.dimension_semantics<parallel>], iteration_bounds = array<i64: 2>, scalar_prefetch = 0 : i64, scratch_operands = 0 : i64, tpu.core_type = #tpu.core_type<tc>, window_params = [{transform_indices = @transform_0, window_bounds = array<i64: 16, 196>}, {pipeline_mode = #tpu.pipeline_mode<synchronous>, transform_indices = @transform_1, window_bounds = array<i64: 196, 32>}, {pipeline_mode = #tpu.pipeline_mode<synchronous>, transform_indices = @transform_2, window_bounds = array<i64: 3, 32>}, {transform_indices = @transform_3, window_bounds = array<i64: 16, 32>}]} {
    %c0 = arith.constant 0 : index
    %c0_0 = arith.constant 0 : index
    %0 = vector.load %arg1[%c0, %c0_0] : memref<16x196xf32, #tpu.memory_space<vmem>>, vector<16x196xf32>
    %c0_1 = arith.constant 0 : index
    %c0_2 = arith.constant 0 : index
    %1 = vector.load %arg2[%c0_1, %c0_2] : memref<196x32xf32, #tpu.memory_space<vmem>>, vector<196x32xf32>
    %cst = arith.constant dense<0.000000e+00> : vector<16x32xf32>
    %2 = tpu.matmul %0, %1, %cst {dimension_numbers = #tpu.dot_dimension_numbers<[1], [0], [0], [1], [0, 0, 1, 1], [], []>} : vector<16x196xf32>, vector<196x32xf32>, vector<16x32xf32> -> vector<16x32xf32>
    %c0_3 = arith.constant 0 : index
    %c0_4 = arith.constant 0 : index
    %3 = vector.load %arg3[%c0_3, %c0_4] : memref<3x32xf32, #tpu.memory_space<vmem>>, vector<1x32xf32>
    %4 = vector.broadcast %3 : vector<1x32xf32> to vector<16x32xf32>
    %5 = arith.addf %2, %4 : vector<16x32xf32>
    %cst_5 = arith.constant dense<0.000000e+00> : vector<16xf32>
    %6 = vector.multi_reduction <add>, %5, %cst_5 [1] : vector<16x32xf32> to vector<16xf32>
    %7 = vector.shape_cast %6 : vector<16xf32> to vector<16x1xf32>
    %cst_6 = arith.constant 3.200000e+01 : f32
    %8 = vector.broadcast %cst_6 : f32 to vector<16x1xf32>
    %9 = arith.divf %7, %8 : vector<16x1xf32>
    %10 = vector.broadcast %9 : vector<16x1xf32> to vector<16x32xf32>
    %11 = arith.subf %5, %10 : vector<16x32xf32>
    %12 = arith.mulf %11, %11 : vector<16x32xf32>
    %cst_7 = arith.constant dense<0.000000e+00> : vector<16xf32>
    %13 = vector.multi_reduction <add>, %12, %cst_7 [1] : vector<16x32xf32> to vector<16xf32>
    %14 = vector.shape_cast %13 : vector<16xf32> to vector<16x1xf32>
    %cst_8 = arith.constant 3.200000e+01 : f32
    %15 = vector.broadcast %cst_8 : f32 to vector<16x1xf32>
    %16 = arith.divf %14, %15 : vector<16x1xf32>
    %cst_9 = arith.constant 9.99999974E-6 : f32
    %17 = vector.broadcast %cst_9 : f32 to vector<16x1xf32>
    %18 = arith.addf %16, %17 : vector<16x1xf32>
    %19 = math.rsqrt %18 : vector<16x1xf32>
    %c1 = arith.constant 1 : index
    %c0_10 = arith.constant 0 : index
    %20 = vector.load %arg3[%c1, %c0_10] : memref<3x32xf32, #tpu.memory_space<vmem>>, vector<1x32xf32>
    %21 = vector.broadcast %19 : vector<16x1xf32> to vector<16x32xf32>
    %22 = vector.broadcast %20 : vector<1x32xf32> to vector<16x32xf32>
    %23 = arith.mulf %21, %22 : vector<16x32xf32>
    %24 = arith.mulf %11, %23 : vector<16x32xf32>
    %c2 = arith.constant 2 : index
    %c0_11 = arith.constant 0 : index
    %25 = vector.load %arg3[%c2, %c0_11] : memref<3x32xf32, #tpu.memory_space<vmem>>, vector<1x32xf32>
    %26 = vector.broadcast %25 : vector<1x32xf32> to vector<16x32xf32>
    %27 = arith.addf %24, %26 : vector<16x32xf32>
    %c0_12 = arith.constant 0 : index
    %c0_13 = arith.constant 0 : index
    %28 = vector.load %arg4[%c0_12, %c0_13] : memref<16x32xf32, #tpu.memory_space<vmem>>, vector<16x32xf32>
    tpu.vector_store %arg4[%c0_12, %c0_13], %27 {strides = array<i32>} : memref<16x32xf32, #tpu.memory_space<vmem>>, vector<16x32xf32>,
    return
  }
  func.func @transform_0(%arg0: i32) -> (i32, i32) {
    %c0_i32 = arith.constant 0 : i32
    %c0_i32_0 = arith.constant 0 : i32
    return %arg0, %c0_i32 : i32, i32
  }
  func.func @transform_1(%arg0: i32) -> (i32, i32) {
    %c0_i32 = arith.constant 0 : i32
    %c0_i32_0 = arith.constant 0 : i32
    %c0_i32_1 = arith.constant 0 : i32
    return %c0_i32, %c0_i32_0 : i32, i32
  }
  func.func @transform_2(%arg0: i32) -> (i32, i32) {
    %c0_i32 = arith.constant 0 : i32
    %c0_i32_0 = arith.constant 0 : i32
    %c0_i32_1 = arith.constant 0 : i32
    return %c0_i32, %c0_i32_0 : i32, i32
  }
  func.func @transform_3(%arg0: i32) -> (i32, i32) {
    %c0_i32 = arith.constant 0 : i32
    %c0_i32_0 = arith.constant 0 : i32
    return %arg0, %c0_i32 : i32, i32
  }
}

</mosaic_0001>

<llo_original>
// kernel: tpu_custom_call.1
$region0: #{tpu_custom_call.1}
  #allocation0 [shape = 'u32[]', space=smem, size = 0x4, offset = 0x4, fixed_abs, tag = 'smem constant byte address 0x4 - core index']
  #allocation1 [shape = 'u32[144,128]{1,0:T(1,128)}', space=vmem, size = 0x12000, scoped, tag = 'internal scratch']
  %s0 = inlined_call_operand.vmem [shape: f32[32,196], index: 0, kind: input, shape index: {}]
  %s1 = inlined_call_operand.vmem [shape: f32[196,32], index: 1, kind: input, shape index: {}]
  %s2 = inlined_call_operand.vmem [shape: f32[3,32], index: 2, kind: input, shape index: {}]
  %s3 = inlined_call_operand.hbm [shape: f32[32,32], index: 3, kind: output, shape index: {}]
  %s4 = sld [smem:[#allocation0]]
  $region45: #{tpu_custom_call.1} parent=0
    _
  %s6 = ssub.s32 1, %s4
  %s7 = scalar_select 0, %s6, %s4
  $region1: #{tpu_custom_call.1} parent=0
    #allocation2 [shape = 'u8[16384]{0}', space=vmem, size = 0x4000, scoped, tag = 'output window, operand 0']
    #allocation3 [shape = 's32[2]{0}', space=sflag, size = 0x8, scoped, tag = 'scoped memory for tpu_custom_call.1']
    %8 = vsyncpa [#allocation3], 0
    %s9 = scalar_lea.sflag [#allocation3], 1
    %10 = vsyncpa %s9, 0
    loop: start=0, step=1, limit=4
    $region2: #{tpu_custom_call.1} parent=1 // loop_pre_header
      _
    $region3: #{tpu_custom_call.1} parent=1 // loop_header
      %s12 = sphi 0, %s16
      %p13 = scmp.ge.s32.totalorder %s12, 4
      %s22 = sphi 0, %s24
      %s25 = sphi 0, %s22
      %s26 = sphi 0, %s25
      %s42 = sphi 0, %s26
      %s46 = sphi 0, %s46
      %s48 = sphi 0, %s46
      %s49 = sphi 0, %s48
      %s63 = sphi 0, %s49
      %s67 = sphi 0, %s67
      %s69 = sphi 0, %s67
      %s70 = sphi 0, %s69
      %s84 = sphi 0, %s70
      %s90 = sphi 0, %s92
      %s93 = sphi 0, %s90
      %s94 = sphi 0, %s93
      %s110 = sphi 0, %s94
    $region4: #{tpu_custom_call.1} parent=1 // loop_header_branch
      %15 = sbr.rel (%p13) target = $region8
    $region5: #{tpu_custom_call.1} parent=1 // loop_body
      %s17 = ssub.s32 %s12, 1
      %s18 = ssub.s32 %s12, 2
      %s19 = sadd.s32 %s12, 1
      %s20 = ssub.s32 %s12, %s19
      %p21 = scmp.eq.s32.totalorder %s20, 0
      %s23 = sadd.s32 %s22, 1
      %s24 = scalar_select %p21, %s22, %s23
      %p27 = pneg %p21
      %p28 = scmp.eq.s32.totalorder %s12, 1
      %p29 = por %p27, %p28
      %p30 = scmp.ne.s32.totalorder %s22, %s25
      %p31 = scmp.eq.s32.totalorder %s12, 0
      %p32 = por %p30, %p31
      %p33 = scmp.ne.s32.totalorder %s22, %s25
      %p34 = scmp.eq.s32.totalorder %s17, 1
      %p35 = por %p33, %p34
      %p36 = scmp.ne.s32.totalorder %s25, %s26
      %p37 = scmp.eq.s32.totalorder %s17, 0
      %p38 = por %p36, %p37
      %p39 = scmp.ne.s32.totalorder %s25, %s26
      %p40 = scmp.eq.s32.totalorder %s18, 1
      %p41 = por %p39, %p40
      %p43 = scmp.ne.s32.totalorder %s26, %s42
      %p44 = scmp.eq.s32.totalorder %s18, 0
      %p45 = por %p43, %p44
      %s47 = sadd.s32 %s46, 1
      %p50 = scmp.eq.s32.totalorder %s12, 1
      %p51 = scmp.ne.s32.totalorder %s46, %s48
      %p52 = scmp.eq.s32.totalorder %s12, 0
      %p53 = por %p51, %p52
      %p54 = scmp.ne.s32.totalorder %s46, %s48
      %p55 = scmp.eq.s32.totalorder %s17, 1
      %p56 = por %p54, %p55
      %p57 = scmp.ne.s32.totalorder %s48, %s49
      %p58 = scmp.eq.s32.totalorder %s17, 0
      %p59 = por %p57, %p58
      %p60 = scmp.ne.s32.totalorder %s48, %s49
      %p61 = scmp.eq.s32.totalorder %s18, 1
      %p62 = por %p60, %p61
      %p64 = scmp.ne.s32.totalorder %s49, %s63
      %p65 = scmp.eq.s32.totalorder %s18, 0
      %p66 = por %p64, %p65
      %s68 = sadd.s32 %s67, 1
      %p71 = scmp.eq.s32.totalorder %s12, 1
      %p72 = scmp.ne.s32.totalorder %s67, %s69
      %p73 = scmp.eq.s32.totalorder %s12, 0
      %p74 = por %p72, %p73
      %p75 = scmp.ne.s32.totalorder %s67, %s69
      %p76 = scmp.eq.s32.totalorder %s17, 1
      %p77 = por %p75, %p76
      %p78 = scmp.ne.s32.totalorder %s69, %s70
      %p79 = scmp.eq.s32.totalorder %s17, 0
      %p80 = por %p78, %p79
      %p81 = scmp.ne.s32.totalorder %s69, %s70
      %p82 = scmp.eq.s32.totalorder %s18, 1
      %p83 = por %p81, %p82
      %p85 = scmp.ne.s32.totalorder %s70, %s84
      %p86 = scmp.eq.s32.totalorder %s18, 0
      %p87 = por %p85, %p86
      %s88 = ssub.s32 %s12, %s19
      %p89 = scmp.eq.s32.totalorder %s88, 0
      %s91 = sadd.s32 %s90, 1
      %s92 = scalar_select %p89, %s90, %s91
      %p95 = pneg %p89
      %p96 = scmp.eq.s32.totalorder %s12, 1
      %p97 = por %p95, %p96
      %p98 = scmp.ne.s32.totalorder %s90, %s93
      %p99 = scmp.eq.s32.totalorder %s12, 0
      %p100 = por %p98, %p99
      %p101 = scmp.ne.s32.totalorder %s90, %s93
      %p102 = scmp.eq.s32.totalorder %s17, 1
      %p103 = por %p101, %p102
      %p104 = scmp.ne.s32.totalorder %s93, %s94
      %p105 = scmp.eq.s32.totalorder %s17, 0
      %p106 = por %p104, %p105
      %p107 = scmp.ne.s32.totalorder %s93, %s94
      %p108 = scmp.eq.s32.totalorder %s18, 1
      %p109 = por %p107, %p108
      %p111 = scmp.ne.s32.totalorder %s94, %s110
      %p112 = scmp.eq.s32.totalorder %s18, 0
      %p113 = por %p111, %p112
      %p114 = scmp.le.s32.totalorder 1, %s12
      %p115 = scmp.lt.s32.totalorder %s12, 3
      %p116 = pnand %p114, %p115
      %p117 = pneg %p116
      // Predicated region
      $region9: #{tpu_custom_call.1} parent=5 // pred_check
        _
      $region10: #{tpu_custom_call.1} parent=5 // pred_check_branch
        %119 = sbr.rel (%p116) target = $region12
      $region11: #{tpu_custom_call.1} parent=5 // pred_region
        %s120 = ssub.s32 %s12, 1
        // Predicated region
        $region13: #{tpu_custom_call.1} parent=11 // pred_check
          %p121 = pneg %p59
        $region14: #{tpu_custom_call.1} parent=11 // pred_check_branch
          %123 = sbr.rel (%p121) target = $region16
        $region15: #{tpu_custom_call.1} parent=11 // pred_region
          _
        $region16: #{tpu_custom_call.1} parent=11 // pred_fallthru
          _
        // Predicated region
        $region17: #{tpu_custom_call.1} parent=11 // pred_check
          %p124 = pneg %p80
        $region18: #{tpu_custom_call.1} parent=11 // pred_check_branch
          %126 = sbr.rel (%p124) target = $region20
        $region19: #{tpu_custom_call.1} parent=11 // pred_region
          _
        $region20: #{tpu_custom_call.1} parent=11 // pred_fallthru
          _
      $region12: #{tpu_custom_call.1} parent=5 // pred_fallthru
        _
      %p127 = scmp.lt.s32.totalorder %s12, 2
      // Predicated region
      $region21: #{tpu_custom_call.1} parent=5 // pred_check
        %p128 = pneg %p127
      $region22: #{tpu_custom_call.1} parent=5 // pred_check_branch
        %130 = sbr.rel (%p128) target = $region24
      $region23: #{tpu_custom_call.1} parent=5 // pred_region
        // Predicated region
        $region25: #{tpu_custom_call.1} parent=23 // pred_check
          %p131 = pneg %p32
        $region26: #{tpu_custom_call.1} parent=23 // pred_check_branch
          %133 = sbr.rel (%p131) target = $region28
        $region27: #{tpu_custom_call.1} parent=23 // pred_region
          %s134 = smul.u32 2, %s12
          %p135 = scmp.lt.s32.totalorder %s134, 3
          %s136 = scalar_select %p135, %s134, 3
          %s137 = smul.addr %s136, 2
          %s138 = smul.addr %s137, 8
          %s139 = scalar_lea.vmem %s0, %s138
          %s140 = smul.u32 2, %s12
        $region28: #{tpu_custom_call.1} parent=23 // pred_fallthru
          _
      $region24: #{tpu_custom_call.1} parent=5 // pred_fallthru
        _
      %p141 = scmp.le.s32.totalorder 1, %s12
      %p142 = scmp.lt.s32.totalorder %s12, 3
      %p143 = pnand %p141, %p142
      %p144 = pneg %p143
      // Predicated region
      $region29: #{tpu_custom_call.1} parent=5 // pred_check
        _
      $region30: #{tpu_custom_call.1} parent=5 // pred_check_branch
        %146 = sbr.rel (%p143) target = $region32
      $region31: #{tpu_custom_call.1} parent=5 // pred_region
        %s147 = ssub.s32 %s12, 1
        %s148 = smul.u32 2, %s17
        %p149 = scmp.lt.s32.totalorder %s148, 3
        %s150 = scalar_select %p149, %s148, 3
        %s151 = smul.addr %s150, 2
        %s152 = smul.addr %s151, 8
        %s153 = scalar_lea.vmem %s0, %s152
        %p154 = pneg %p38
        %p155 = pneg %p35
        %p156 = pneg %p59
        %p157 = pneg %p56
        %p158 = pneg %p80
        %p159 = pneg %p77
        %p160 = pneg %p106
        %p161 = pneg %p103
        %s162 = sand.u32 %s93, 1
        %s163 = scalar_lea.sflag [#allocation3], %s162
        %s164 = sand.u32 %s93, 1
        %s165 = smul.addr %s164, 16
        %s166 = scalar_lea.vmem [#allocation2], %s165
        %s167 = smul.u32 2, %s17
        %p168 = scmp.lt.s32.totalorder %s167, 3
        %s169 = scalar_select %p168, %s167, 3
        %s170 = smul.addr %s169, 2
        %s171 = smul.addr %s170, 8
        %s172 = scalar_lea.vmem %s0, %s171
        %s173 = smul.u32 2, %s17
        %s174 = smul.u32 2, %s17
        %v175 = vld [vmem:[%s172] sm:$0xff]
        %v176 = vld [vmem:[%s172 + $0x8] sm:$0xff]
        %v177 = vld [vmem:[%s172 + $0x10] sm:$0xff]
        %v178 = vld [vmem:[%s172 + $0x18] sm:$0xff]
        %v179 = vld [vmem:[%s1] sm:$0xff]
        %v180 = vld [vmem:[%s1 + $0x8] sm:$0xff]
        %v181 = vld [vmem:[%s1 + $0x10] sm:$0xff]
        %v182 = vld [vmem:[%s1 + $0x18] sm:$0xff]
        %v183 = vld [vmem:[%s1 + $0x20] sm:$0xff]
        %v184 = vld [vmem:[%s1 + $0x28] sm:$0xff]
        %v185 = vld [vmem:[%s1 + $0x30] sm:$0xff]
        %v186 = vld [vmem:[%s1 + $0x38] sm:$0xff]
        %v187 = vld [vmem:[%s1 + $0x40] sm:$0xff]
        %v188 = vld [vmem:[%s1 + $0x48] sm:$0xff]
        %v189 = vld [vmem:[%s1 + $0x50] sm:$0xff]
        %v190 = vld [vmem:[%s1 + $0x58] sm:$0xff]
        %v191 = vld [vmem:[%s1 + $0x60] sm:$0xff]
        %v192 = vld [vmem:[%s1 + $0x68] sm:$0xff]
        %v193 = vld [vmem:[%s1 + $0x70] sm:$0xff]
        %v194 = vld [vmem:[%s1 + $0x78] sm:$0xff]
        %v195 = vld [vmem:[%s1 + $0x80] sm:$0xff]
        %v196 = vld [vmem:[%s1 + $0x88] sm:$0xff]
        %v197 = vld [vmem:[%s1 + $0x90] sm:$0xff]
        %v198 = vld [vmem:[%s1 + $0x98] sm:$0xff]
        %v199 = vld [vmem:[%s1 + $0xa0] sm:$0xff]
        %v200 = vld [vmem:[%s1 + $0xa8] sm:$0xff]
        %v201 = vld [vmem:[%s1 + $0xb0] sm:$0xff]
        %v202 = vld [vmem:[%s1 + $0xb8] sm:$0xff]
        %v203 = vld [vmem:[%s1 + $0xc0] sm:$0xf]
        %v204 = vld [vmem:[%s2] sm:$0x1]
        %v205 = vlaneseq
        %v206 = vshrl.u32 %v205, 7
        %v207 = vsub.s32 0, %v206
        %v208 = vrot.slane %v204, %v207
        %vm209 = vcmask 556032
        %v211 = vsel %vm209, %v176, 0
        %v214 = vsel %vm209, %v178, 0
        %vm216 = vcmask 1043456
        %v218 = vsel %vm216, %v203, 0
        %220 = vmatprep.subr.mxu0 0.0
        %221 = vmatpush1.msra.mxu0 %v194
        %222 = vmatprep.subr.mxu0 0.0
        %223 = vmatpush1.msra.mxu0 %v193
        %224 = vmatprep.subr.mxu0 0.0
        %225 = vmatpush1.msra.mxu0 %v192
        %226 = vmatprep.subr.mxu0 0.0
        %227 = vmatpush1.msra.mxu0 %v191
        %228 = vmatprep.subr.mxu0 0.0
        %229 = vmatpush1.msra.mxu0 %v190
        %230 = vmatprep.subr.mxu0 0.0
        %231 = vmatpush1.msra.mxu0 %v189
        %232 = vmatprep.subr.mxu0 0.0
        %233 = vmatpush1.msra.mxu0 %v188
        %234 = vmatprep.subr.mxu0 0.0
        %235 = vmatpush1.msra.mxu0 %v187
        %236 = vmatprep.subr.mxu0 0.0
        %237 = vmatpush1.msra.mxu0 %v186
        %238 = vmatprep.subr.mxu0 0.0
        %239 = vmatpush1.msra.mxu0 %v185
        %240 = vmatprep.subr.mxu0 0.0
        %241 = vmatpush1.msra.mxu0 %v184
        %242 = vmatprep.subr.mxu0 0.0
        %243 = vmatpush1.msra.mxu0 %v183
        %244 = vmatprep.subr.mxu0 0.0
        %245 = vmatpush1.msra.mxu0 %v182
        %246 = vmatprep.subr.mxu0 0.0
        %247 = vmatpush1.msra.mxu0 %v181
        %248 = vmatprep.subr.mxu0 0.0
        %249 = vmatpush1.msra.mxu0 %v180
        %250 = vmatprep.subr.mxu0 0.0
        %251 = vmatpush1.msra.mxu0 %v179
        %252 = vmatprep.subr.mxu0 0.0
        %253 = vmatpush2.msra.mxu0 0.0
        %254 = vmatprep.subr.mxu0 0.0
        %255 = vmatpush2.msra.mxu0 0.0
        %256 = vmatprep.subr.mxu0 0.0
        %257 = vmatpush2.msra.mxu0 0.0
        %258 = vmatprep.subr.mxu0 0.0
        %259 = vmatpush2.msra.mxu0 0.0
        %260 = vmatprep.subr.mxu0 0.0
        %261 = vmatpush2.msra.mxu0 0.0
        %262 = vmatprep.subr.mxu0 0.0
        %263 = vmatpush2.msra.mxu0 0.0
        %264 = vmatprep.subr.mxu0 0.0
        %265 = vmatpush2.msra.mxu0 0.0
        %266 = vmatprep.subr.mxu0 0.0
        %267 = vmatpush2.msra.mxu0 %v218
        %268 = vmatprep.subr.mxu0 0.0
        %269 = vmatpush2.msra.mxu0 %v202
        %270 = vmatprep.subr.mxu0 0.0
        %271 = vmatpush2.msra.mxu0 %v201
        %272 = vmatprep.subr.mxu0 0.0
        %273 = vmatpush2.msra.mxu0 %v200
        %274 = vmatprep.subr.mxu0 0.0
        %275 = vmatpush2.msra.mxu0 %v199
        %276 = vmatprep.subr.mxu0 0.0
        %277 = vmatpush2.msra.mxu0 %v198
        %278 = vmatprep.subr.mxu0 0.0
        %279 = vmatpush2.msra.mxu0 %v197
        %280 = vmatprep.subr.mxu0 0.0
        %281 = vmatpush2.msra.mxu0 %v196
        %282 = vmatprep.subr.mxu0 0.0
        %283 = vmatpush2.msra.mxu0 %v195
        %284 = vmatprep.mubr.f32.mxu0 %v211
        %285 = vmatmul.mubr.f32.gmra.mxu0 %v175
        %v286 = vpop.f32.mrf.mxu0
        %v287 = vadd.f32 %v208, %v286
        %v288 = vpop.f32.mrf.mxu0
        %289 = vmatprep.mubr.f32.mxu0 %v214
        %290 = vmatmul.mubr.f32.gmra.mxu0 %v177
        %v291 = vpop.f32.mrf.mxu0
        %v292 = vadd.f32 %v208, %v291
        %v293 = vpop.f32.mrf.mxu0
        %294 = vdwg.mxu0
        %vm295 = vcmask 261120
        %v296 = vsel %vm295, %v287, 0.0
        %297 = vadd.xlane.f32.xlu0 %v296
        %v298 = vpop.xlane.xlu0 %297
        %v299 = vsel %vm295, %v292, 0.0
        %300 = vadd.xlane.f32.xlu0 %v299
        %v301 = vpop.xlane.xlu0 %300
        %v302 = vrcp.pop 32.0
        %v303 = vmul.f32 %v298, %v302
        %v304 = vmul.f32 %v301, %v302
        %v305 = vsub.f32 %v287, %v303
        %v306 = vsub.f32 %v292, %v304
        %v307 = vmul.f32 %v305, %v305
        %v308 = vmul.f32 %v306, %v306
        %v309 = vsel %vm295, %v307, 0.0
        %310 = vadd.xlane.f32.xlu0 %v309
        %v311 = vpop.xlane.xlu0 %310
        %v312 = vsel %vm295, %v308, 0.0
        %313 = vadd.xlane.f32.xlu0 %v312
        %v314 = vpop.xlane.xlu0 %313
        %v315 = vmul.f32 %v311, %v302
        %v316 = vmul.f32 %v314, %v302
        %v317 = vadd.f32 %v315, 1e-05
        %v318 = vadd.f32 %v316, 1e-05
        %v319 = vrsqrt.pop %v317
        %v320 = vrsqrt.pop %v318
        %v321 = vld [vmem:[%s2 + $0x1] sm:$0x1]
        %v322 = vlaneseq
        %v323 = vshrl.u32 %v322, 7
        %v324 = vsub.s32 0, %v323
        %v325 = vrot.slane %v321, %v324
        %v326 = vmul.f32 %v319, %v325
        %v327 = vmul.f32 %v320, %v325
        %v328 = vmul.f32 %v305, %v326
        %v329 = vmul.f32 %v306, %v327
        %v330 = vld [vmem:[%s2 + $0x2] sm:$0x1]
        %v331 = vlaneseq
        %v332 = vshrl.u32 %v331, 7
        %v333 = vsub.s32 0, %v332
        %v334 = vrot.slane %v330, %v333
        %v335 = vadd.f32 %v328, %v334
        %v336 = vadd.f32 %v329, %v334
        %337 = vst.msk [vmem:[%s166] sm:$0xff] %vm295, %v335
        %338 = vst.msk [vmem:[%s166 + $0x8] sm:$0xff] %vm295, %v336
        %s339 = sand.u32 %s93, 1
        %s340 = scalar_lea.sflag [#allocation3], %s339
        %s341 = sand.u32 %s93, 1
        %s342 = smul.addr %s341, 16
        %s343 = scalar_lea.vmem [#allocation2], %s342
        // Predicated region
        $region33: #{tpu_custom_call.1} parent=31 // pred_check
          %p344 = pneg %p103
        $region34: #{tpu_custom_call.1} parent=31 // pred_check_branch
          %346 = sbr.rel (%p344) target = $region36
        $region35: #{tpu_custom_call.1} parent=31 // pred_region
          %s347 = smul.u32 2, %s17
          %s349 = ssub.s32 256, 256
          %350 = vsyncadd %s340, %s349
          %s351 = smul.addr %s347, 128
          %s352 = scalar_lea.hbm %s3, %s351
          %s353 = sshll.u32 %s343, 4
          %s354 = int_to_ptr.vmem [resolvable:$true] %s353
          %359 = dma.vmem_to_hbm [thread:$0]  %s354, 256, %s352, %s340, 128, 128, 8
        $region36: #{tpu_custom_call.1} parent=31 // pred_fallthru
          _
      $region32: #{tpu_custom_call.1} parent=5 // pred_fallthru
        _
      %p360 = scmp.le.s32.totalorder 2, %s12
      // Predicated region
      $region37: #{tpu_custom_call.1} parent=5 // pred_check
        %p361 = pneg %p360
      $region38: #{tpu_custom_call.1} parent=5 // pred_check_branch
        %363 = sbr.rel (%p361) target = $region40
      $region39: #{tpu_custom_call.1} parent=5 // pred_region
        %s364 = ssub.s32 %s12, 2
        // Predicated region
        $region41: #{tpu_custom_call.1} parent=39 // pred_check
          %p365 = pneg %p109
        $region42: #{tpu_custom_call.1} parent=39 // pred_check_branch
          %367 = sbr.rel (%p365) target = $region44
        $region43: #{tpu_custom_call.1} parent=39 // pred_region
          %s368 = sand.u32 %s94, 1
          %s369 = scalar_lea.sflag [#allocation3], %s368
          %s370 = sand.u32 %s94, 1
          %s371 = smul.addr %s370, 16
          %s372 = scalar_lea.vmem [#allocation2], %s371
          %373 = dma.done %s369, 256
        $region44: #{tpu_custom_call.1} parent=39 // pred_fallthru
          _
      $region40: #{tpu_custom_call.1} parent=5 // pred_fallthru
        _
    $region6: #{tpu_custom_call.1} parent=1 // loop_footer
      %s16 = sadd.s32 1, %s12
    $region7: #{tpu_custom_call.1} parent=1 // loop_footer_branch
      %11 = sbr.rel target = $region3
    $region8: #{tpu_custom_call.1} parent=1 // loop_exit
      _
    %374 = vsyncpa [#allocation3], 1
    %s375 = scalar_lea.sflag [#allocation3], 1
    %376 = vsyncpa %s375, 1

</llo_original>
